<compile_context>
chip_gen: v7x
topology: tpu7x:2x2x1
jax: 0.10.0
libtpu: 0.0.40
codegen_flags: <defaults>
</compile_context>

<pallas_src>
import jax
import jax.numpy as jnp
from jax.experimental import pallas as pl
from jax.experimental.pallas import tpu as pltpu


def fused_linear_add_relu_kernel(x_ref, w1_ref, b_ref, o_ref):
    # x_ref : (1, TN)   -- batch on the lane axis
    # w1_ref: (OUT, 1)  -- (weight + 1) column (residual folded in, K == 1)
    # b_ref : (OUT, 1)  -- bias column
    # o_ref : (OUT, TN)
    #
    # NOTE: on a partial last tile the padded lanes of x_ref hold garbage;
    # the results there are discarded by the masked writeback, so this is
    # benign by construction -- do not "fix" it.
    x = x_ref[...]                          # (1, TN)
    w1 = w1_ref[...]                        # (OUT, 1)
    b = b_ref[...]                          # (OUT, 1)
    y = w1 * x + b                          # outer product + bias (VPU only)
    o_ref[...] = jnp.maximum(y, 0.0).astype(o_ref.dtype)


def _jnp_forward(x, w, b):
    # Reference / small-batch path: let XLA fuse it.
    return jnp.maximum((x @ w.T + b) + x, 0.0)


def model_forward(x, w, b, *, tile_n=65536, min_pallas_batch=4096,
                  transposed_output=False):
    """relu(Linear(1, OUT)(x) + x).

    x: (N, 1) f32, w: (OUT, 1) f32, b: (OUT,) f32.
    Returns (N, OUT) f32 (or (OUT, N) if transposed_output=True).
    """
    N, K = x.shape
    assert K == 1, "module is Linear(in_features=1, out_features=10)"
    out_f = w.shape[0]

    # Tiny batches: pallas_call is pure launch overhead, use fused XLA.
    if N < min_pallas_batch:
        out = _jnp_forward(x, w, b)
        return out.T if transposed_output else out

    # Free layout plumbing ((N,1) row-major == flat N, so reshape is a no-op).
    x_t = x.reshape(1, N)                    # batch -> lane axis
    w1_col = w.reshape(out_f, 1) + 1.0       # fold the +x residual into w
    b_col = b.reshape(out_f, 1)

    # Tile selection:
    #  - lane axis tiles must be a multiple of 128 (or the full extent N)
    #  - prefer >= 2 grid steps so v7x's two TensorCores both participate
    #  - cap at tile_n so the double-buffered footprint (~192*tn B) stays well
    #    inside every generation's scoped VMEM budget.
    if N <= 256:
        tn = N                               # single full-extent tile
    else:
        half_aligned = ((((N + 1) // 2) + 127) // 128) * 128
        tn = min(tile_n, half_aligned)
    grid = (pl.cdiv(N, tn),)

    cost = pl.CostEstimate(
        flops=3 * out_f * N,                 # mul + add + relu per output elem
        transcendentals=0,
        bytes_accessed=(N + out_f * N + 2 * out_f) * 4,
    )

    out_t = pl.pallas_call(
        fused_linear_add_relu_kernel,
        out_shape=jax.ShapeDtypeStruct((out_f, N), x.dtype),
        grid=grid,
        in_specs=[
            pl.BlockSpec((1, tn), lambda i: (0, i)),       # x_T tile
            pl.BlockSpec((out_f, 1), lambda i: (0, 0)),    # w+1 (resident)
            pl.BlockSpec((out_f, 1), lambda i: (0, 0)),    # b   (resident)
        ],
        out_specs=pl.BlockSpec((out_f, tn), lambda i: (0, i)),
        compiler_params=pltpu.CompilerParams(
            dimension_semantics=("parallel",),
            vmem_limit_bytes=32 * 1024 * 1024,
        ),
        cost_estimate=cost,
    )(x_t, w1_col, b_col)

    if transposed_output:
        return out_t                         # lane-dense (OUT, N), no HBM pass
    # TODO(synk): if the downstream consumer can take (OUT, N), prefer
    # transposed_output=True -- this .T is a second full HBM pass at large N.
    return out_t.T


if __name__ == "__main__":
    size = 1             # Linear in_features (as in the PyTorch module)
    out_features = 10
    batch = 16

    key = jax.random.PRNGKey(0)
    kx, kw, kb, kx2 = jax.random.split(key, 4)

    # PyTorch-Linear-like deterministic init: uniform(-1/sqrt(fan_in), +)
    bound = 1.0 / (size ** 0.5)
    w = jax.random.uniform(kw, (out_features, size), jnp.float32, -bound, bound)
    b = jax.random.uniform(kb, (out_features,), jnp.float32, -bound, bound)

    # Input consistent with the forward pass: (batch, size)
    x1 = jax.random.normal(kx, (batch, size), jnp.float32)

    # Force the Pallas path even at this tiny size so the kernel is exercised.
    out = model_forward(x1, w, b, min_pallas_batch=0)
    out = jax.block_until_ready(out)

    ref = _jnp_forward(x1, w, b)
    assert out.shape == (batch, out_features)
    assert jnp.allclose(out, ref, atol=1e-5, rtol=1e-5), "mismatch vs reference"

    # Also exercise the multi-tile / partial-last-tile path (grid of 2, last
    # tile masked) at a still-small size.
    x2 = jax.random.normal(kx2, (384, size), jnp.float32)
    out2 = jax.block_until_ready(model_forward(x2, w, b, min_pallas_batch=0))
    ref2 = _jnp_forward(x2, w, b)
    assert out2.shape == (384, out_features)
    assert jnp.allclose(out2, ref2, atol=1e-5, rtol=1e-5), "mismatch (multi-tile)"

    print("KERNEL_OK")
</pallas_src>

<mosaic_0001>
module attributes {stable_mosaic.version = 11 : i64} {
  func.func @fused_linear_add_relu_kernel(%arg0: i32, %arg1: memref<1x16xf32, #tpu.memory_space<vmem>>, %arg2: memref<10x1xf32, #tpu.memory_space<vmem>>, %arg3: memref<10x1xf32, #tpu.memory_space<vmem>>, %arg4: memref<10x16xf32, #tpu.memory_space<vmem>>) attributes {dimension_semantics = [#tpu.dimension_semantics<parallel>], iteration_bounds = array<i64: 1>, scalar_prefetch = 0 : i64, scratch_operands = 0 : i64, tpu.core_type = #tpu.core_type<tc>, window_params = [{transform_indices = @transform_0, window_bounds = array<i64: 1, 16>}, {pipeline_mode = #tpu.pipeline_mode<synchronous>, transform_indices = @transform_1, window_bounds = array<i64: 10, 1>}, {pipeline_mode = #tpu.pipeline_mode<synchronous>, transform_indices = @transform_2, window_bounds = array<i64: 10, 1>}, {transform_indices = @transform_3, window_bounds = array<i64: 10, 16>}]} {
    %c0 = arith.constant 0 : index
    %c0_0 = arith.constant 0 : index
    %0 = vector.load %arg1[%c0, %c0_0] : memref<1x16xf32, #tpu.memory_space<vmem>>, vector<1x16xf32>
    %c0_1 = arith.constant 0 : index
    %c0_2 = arith.constant 0 : index
    %1 = vector.load %arg2[%c0_1, %c0_2] : memref<10x1xf32, #tpu.memory_space<vmem>>, vector<10x1xf32>
    %c0_3 = arith.constant 0 : index
    %c0_4 = arith.constant 0 : index
    %2 = vector.load %arg3[%c0_3, %c0_4] : memref<10x1xf32, #tpu.memory_space<vmem>>, vector<10x1xf32>
    %3 = vector.broadcast %1 : vector<10x1xf32> to vector<10x16xf32>
    %4 = vector.broadcast %0 : vector<1x16xf32> to vector<10x16xf32>
    %5 = arith.mulf %3, %4 : vector<10x16xf32>
    %6 = vector.broadcast %2 : vector<10x1xf32> to vector<10x16xf32>
    %7 = arith.addf %5, %6 : vector<10x16xf32>
    %cst = arith.constant 0.000000e+00 : f32
    %8 = vector.broadcast %cst : f32 to vector<10x16xf32>
    %9 = arith.maximumf %7, %8 : vector<10x16xf32>
    %c0_5 = arith.constant 0 : index
    %c0_6 = arith.constant 0 : index
    %10 = vector.load %arg4[%c0_5, %c0_6] : memref<10x16xf32, #tpu.memory_space<vmem>>, vector<10x16xf32>
    tpu.vector_store %arg4[%c0_5, %c0_6], %9 {strides = array<i32>} : memref<10x16xf32, #tpu.memory_space<vmem>>, vector<10x16xf32>,
    return
  }
  func.func @transform_0(%arg0: i32) -> (i32, i32) {
    %c0_i32 = arith.constant 0 : i32
    %c0_i32_0 = arith.constant 0 : i32
    return %c0_i32, %arg0 : i32, i32
  }
  func.func @transform_1(%arg0: i32) -> (i32, i32) {
    %c0_i32 = arith.constant 0 : i32
    %c0_i32_0 = arith.constant 0 : i32
    %c0_i32_1 = arith.constant 0 : i32
    return %c0_i32, %c0_i32_0 : i32, i32
  }
  func.func @transform_2(%arg0: i32) -> (i32, i32) {
    %c0_i32 = arith.constant 0 : i32
    %c0_i32_0 = arith.constant 0 : i32
    %c0_i32_1 = arith.constant 0 : i32
    return %c0_i32, %c0_i32_0 : i32, i32
  }
  func.func @transform_3(%arg0: i32) -> (i32, i32) {
    %c0_i32 = arith.constant 0 : i32
    %c0_i32_0 = arith.constant 0 : i32
    return %c0_i32, %arg0 : i32, i32
  }
}

</mosaic_0001>

<llo_original>
// kernel: tpu_custom_call.1
$region0: #{tpu_custom_call.1}
  #allocation0 [shape = 'u32[]', space=smem, size = 0x4, offset = 0x4, fixed_abs, tag = 'smem constant byte address 0x4 - core index']
  #allocation1 [shape = 'u32[144,128]{1,0:T(1,128)}', space=vmem, size = 0x12000, scoped, tag = 'internal scratch']
  %s0 = inlined_call_operand.vmem [shape: f32[1,16], index: 0, kind: input, shape index: {}]
  %s1 = inlined_call_operand.vmem [shape: f32[10,1], index: 1, kind: input, shape index: {}]
  %s2 = inlined_call_operand.vmem [shape: f32[10,1], index: 2, kind: input, shape index: {}]
  %s3 = inlined_call_operand.hbm [shape: f32[10,16], index: 3, kind: output, shape index: {}]
  %s4 = sld [smem:[#allocation0]]
  $region22: #{tpu_custom_call.1} parent=0
    _
  %s6 = ssub.s32 1, %s4
  %s7 = scalar_select 0, %s6, %s4
  $region1: #{tpu_custom_call.1} parent=0
    #allocation2 [shape = 'u8[8192]{0}', space=vmem, size = 0x2000, scoped, tag = 'output window, operand 0, single buffered']
    #allocation3 [shape = 's32[1]{0}', space=sflag, size = 0x4, scoped, tag = 'scoped memory for tpu_custom_call.1']
    %8 = vsyncpa [#allocation3], 0
    // Predicated region
    $region2: #{tpu_custom_call.1} parent=1 // pred_check
      _
    $region3: #{tpu_custom_call.1} parent=1 // pred_check_branch
      %10 = sbr.rel (0) target = $region5
    $region4: #{tpu_custom_call.1} parent=1 // pred_region
      _
    $region5: #{tpu_custom_call.1} parent=1 // pred_fallthru
      _
    // Predicated region
    $region6: #{tpu_custom_call.1} parent=1 // pred_check
      _
    $region7: #{tpu_custom_call.1} parent=1 // pred_check_branch
      %12 = sbr.rel (0) target = $region9
    $region8: #{tpu_custom_call.1} parent=1 // pred_region
      _
    $region9: #{tpu_custom_call.1} parent=1 // pred_fallthru
      _
    // Predicated region
    $region10: #{tpu_custom_call.1} parent=1 // pred_check
      _
    $region11: #{tpu_custom_call.1} parent=1 // pred_check_branch
      %14 = sbr.rel (0) target = $region13
    $region12: #{tpu_custom_call.1} parent=1 // pred_region
      _
    $region13: #{tpu_custom_call.1} parent=1 // pred_fallthru
      _
    %v15 = vld [vmem:[%s0] sm:$0x1]
    %v16 = vld [vmem:[%s1] sm:$0xff]
    %v17 = vld [vmem:[%s1 + $0x8] sm:$0x3]
    %v18 = vld [vmem:[%s2] sm:$0xff]
    %v19 = vld [vmem:[%s2 + $0x8] sm:$0x3]
    %21 = vset.pattern.permute.xlu0 0
    %22 = vperm.xlu0 %21, %v16
    %v23 = vpop.permute.xlu0 %22
    %26 = vset.pattern.permute.xlu0 0
    %27 = vperm.xlu0 %26, %v17
    %v28 = vpop.permute.xlu0 %27
    %v31 = vlaneseq
    %v32 = vshrl.u32 %v31, 7
    %v33 = vsub.s32 0, %v32
    %v34 = vrot.slane %v15, %v33
    %v36 = vmul.f32 %v23, %v34
    %v37 = vmul.f32 %v28, %v34
    %39 = vset.pattern.permute.xlu0 0
    %40 = vperm.xlu0 %39, %v18
    %v41 = vpop.permute.xlu0 %40
    %44 = vset.pattern.permute.xlu0 0
    %45 = vperm.xlu0 %44, %v19
    %v46 = vpop.permute.xlu0 %45
    %v48 = vadd.f32 %v36, %v41
    %v49 = vadd.f32 %v37, %v46
    %v50 = vmax.f32 %v48, 0.0
    %v51 = vmax.f32 %v49, 0.0
    %vm52 = vcmask 130048
    %53 = vst.msk [vmem:[#allocation2] sm:$0xff] %vm52, %v50
    %vm54 = vcmask 123904
    %55 = vst.msk [vmem:[#allocation2 + $0x8] sm:$0x3] %vm54, %v51
    // Predicated region
    $region14: #{tpu_custom_call.1} parent=1 // pred_check
      _
    $region15: #{tpu_custom_call.1} parent=1 // pred_check_branch
      %57 = sbr.rel (0) target = $region17
    $region16: #{tpu_custom_call.1} parent=1 // pred_region
      %s59 = ssub.s32 256, 256
      %60 = vsyncadd [#allocation3], %s59
      %s61 = sshll.u32 [#allocation2], 4
      %s62 = int_to_ptr.vmem [resolvable:$true] %s61
      %67 = dma.vmem_to_hbm [thread:$0]  %s62, 256, %s3, [#allocation3], 128, 128, 8
    $region17: #{tpu_custom_call.1} parent=1 // pred_fallthru
      _
    // Predicated region
    $region18: #{tpu_custom_call.1} parent=1 // pred_check
      _
    $region19: #{tpu_custom_call.1} parent=1 // pred_check_branch
      %69 = sbr.rel (0) target = $region21
    $region20: #{tpu_custom_call.1} parent=1 // pred_region
      %70 = dma.done [#allocation3], 256
    $region21: #{tpu_custom_call.1} parent=1 // pred_fallthru
      _
    %71 = vsyncpa [#allocation3], 1

</llo_original>
